<compile_context>
chip_gen: v5e
topology: v5e:2x2
jax: 0.10.0
libtpu: 0.0.40
codegen_flags: <defaults>
</compile_context>

<pallas_src>
import math

import jax
import jax.numpy as jnp
from jax.experimental import pallas as pl
from jax.experimental.pallas import tpu as pltpu

_LANE = 128
_VMEM_TILE_BUDGET = 4 * 1024 * 1024   # bytes for 3 inputs x 2 pipeline buffers
_MAX_TILE_T = 2048                    # cap on frames per tile


def _glow_loss_kernel(z_ref, m_ref, s_ref, out_ref):
    """One (batch b, frame-tile t) grid step.

    Block shapes:
      z_ref, m_ref, s_ref : (1, C, tT)  VMEM
      out_ref             : (1, 2, tT)  VMEM, resident across the t axis
        row 0: lane-wise partial of sum(scales)
        row 1: lane-wise partial of 0.5 * sum(exp(-2*scales) * (z - means)^2)
    """
    t = pl.program_id(1)

    @pl.when(t == 0)
    def _():
        out_ref[...] = jnp.zeros_like(out_ref)

    s = s_ref[0].astype(jnp.float32)                                  # (C, tT)
    diff = z_ref[0].astype(jnp.float32) - m_ref[0].astype(jnp.float32)
    quad = 0.5 * jnp.exp(-2.0 * s) * (diff * diff)

    p_scales = jnp.sum(s, axis=0, keepdims=True)                      # (1, tT)
    p_quad = jnp.sum(quad, axis=0, keepdims=True)                     # (1, tT)
    out_ref[0] += jnp.concatenate([p_scales, p_quad], axis=0)         # (2, tT)


def _frame_tile(C, T, itemsize):
    """Largest lane-aligned frame tile keeping 3 x 2 buffers near the budget."""
    per_col = 6 * C * itemsize                     # 3 inputs x 2 buffers x C
    t_budget = max(_LANE, (_VMEM_TILE_BUDGET // per_col) // _LANE * _LANE)
    t_full = pl.cdiv(T, _LANE) * _LANE             # whole lane-padded sequence
    return int(min(t_budget, _MAX_TILE_T, t_full))


def glow_tts_loss(z, means, scales, log_det, y_lengths, o_dur_log, o_attn_dur,
                  x_lengths, frame_tile=None):
    B, C, T = z.shape

    itemsize = jnp.dtype(z.dtype).itemsize
    if frame_tile is None:
        tT = _frame_tile(C, T, itemsize)
    else:
        assert frame_tile % _LANE == 0, "frame_tile must be a multiple of 128"
        tT = int(frame_tile)

    # Zero-pad the frame axis to a multiple of the tile.  Zero pad is exact:
    # scales=0 adds 0 to sum(scales) and exp(0)*(0-0)^2 = 0 to the quad term.
    T_pad = pl.cdiv(T, tT) * tT
    if T_pad != T:
        pad = ((0, 0), (0, 0), (0, T_pad - T))
        z = jnp.pad(z, pad)
        means = jnp.pad(means, pad)
        scales = jnp.pad(scales, pad)
    nT = T_pad // tT

    parts = pl.pallas_call(
        _glow_loss_kernel,
        out_shape=jax.ShapeDtypeStruct((B, 2, tT), jnp.float32),
        grid_spec=pltpu.PrefetchScalarGridSpec(
            num_scalar_prefetch=0,
            grid=(B, nT),
            in_specs=[
                pl.BlockSpec((1, C, tT), lambda b, t: (b, 0, t)),   # z
                pl.BlockSpec((1, C, tT), lambda b, t: (b, 0, t)),   # means
                pl.BlockSpec((1, C, tT), lambda b, t: (b, 0, t)),   # scales
            ],
            out_specs=pl.BlockSpec((1, 2, tT), lambda b, t: (b, 0, 0)),
        ),
        compiler_params=pltpu.CompilerParams(
            dimension_semantics=("parallel", "arbitrary")),
    )(z, means, scales)

    # Final reductions + scalar glue in plain JAX (cheap, tree-reduced).
    sum_scales = jnp.sum(parts[:, 0, :])
    half_quad = jnp.sum(parts[:, 1, :])

    constant_factor = jnp.float32(0.5 * math.log(2.0 * math.pi))
    pz = sum_scales + half_quad
    denom = jnp.sum(y_lengths).astype(jnp.float32) * jnp.float32(T)   # original T
    log_mle = constant_factor + (pz - jnp.sum(log_det).astype(jnp.float32)) / denom

    # Duration MSE: tiny (B x Tx) -- done in plain JAX instead of the kernel.
    ddiff = o_dur_log.astype(jnp.float32) - o_attn_dur.astype(jnp.float32)
    loss_dur = jnp.sum(ddiff * ddiff) / jnp.sum(x_lengths).astype(jnp.float32)

    loss = log_mle + loss_dur
    return {"loss": loss, "log_mle": log_mle, "loss_dur": loss_dur}


def _reference(z, means, scales, log_det, y_lengths, o_dur_log, o_attn_dur,
               x_lengths):
    """Pure-JAX reference (mirrors the PyTorch forward exactly)."""
    constant_factor = 0.5 * math.log(2.0 * math.pi)
    zf = z.astype(jnp.float32)
    mf = means.astype(jnp.float32)
    sf = scales.astype(jnp.float32)
    pz = jnp.sum(sf) + 0.5 * jnp.sum(jnp.exp(-2.0 * sf) * (zf - mf) ** 2)
    log_mle = constant_factor + (pz - jnp.sum(log_det)) / (
        jnp.sum(y_lengths).astype(jnp.float32) * z.shape[2])
    dd = o_dur_log.astype(jnp.float32) - o_attn_dur.astype(jnp.float32)
    loss_dur = jnp.sum(dd ** 2) / jnp.sum(x_lengths).astype(jnp.float32)
    return {"loss": log_mle + loss_dur, "log_mle": log_mle, "loss_dur": loss_dur}


def _check(out, ref):
    for name in ("loss", "log_mle", "loss_dur"):
        if bool(jnp.isnan(out[name])):
            # mirrors the PyTorch NaN guard
            raise RuntimeError(f" [!] NaN loss with {name}.")
        assert jnp.allclose(out[name], ref[name], rtol=1e-5, atol=1e-5), (
            name, out[name], ref[name])


if __name__ == "__main__":
    key = jax.random.PRNGKey(0)

    # --- primary small-shape test (single frame tile) -----------------------
    B, C, T, Tx = 2, 4, 16, 8
    k = jax.random.split(key, 6)
    z = jax.random.normal(k[0], (B, C, T), dtype=jnp.float32)
    means = jax.random.normal(k[1], (B, C, T), dtype=jnp.float32)
    scales = 0.1 * jax.random.normal(k[2], (B, C, T), dtype=jnp.float32)
    log_det = jax.random.normal(k[3], (B,), dtype=jnp.float32)
    o_dur_log = jax.random.normal(k[4], (B, 1, Tx), dtype=jnp.float32)
    o_attn_dur = jax.random.normal(k[5], (B, 1, Tx), dtype=jnp.float32)
    y_lengths = jnp.array([T, T - 2], dtype=jnp.int32)
    x_lengths = jnp.array([Tx, Tx - 1], dtype=jnp.int32)

    out = glow_tts_loss(z, means, scales, log_det, y_lengths, o_dur_log,
                        o_attn_dur, x_lengths)
    out = jax.tree_util.tree_map(jax.block_until_ready, out)
    _check(out, _reference(z, means, scales, log_det, y_lengths, o_dur_log,
                           o_attn_dur, x_lengths))

    # --- secondary test: ragged T + multiple frame tiles + accumulation -----
    T2 = 300
    k2 = jax.random.split(jax.random.PRNGKey(1), 3)
    z2 = jax.random.normal(k2[0], (B, C, T2), dtype=jnp.float32)
    means2 = jax.random.normal(k2[1], (B, C, T2), dtype=jnp.float32)
    scales2 = 0.1 * jax.random.normal(k2[2], (B, C, T2), dtype=jnp.float32)
    y_lengths2 = jnp.array([T2, T2 - 17], dtype=jnp.int32)

    out2 = glow_tts_loss(z2, means2, scales2, log_det, y_lengths2, o_dur_log,
                         o_attn_dur, x_lengths, frame_tile=128)  # force nT=3
    out2 = jax.tree_util.tree_map(jax.block_until_ready, out2)
    _check(out2, _reference(z2, means2, scales2, log_det, y_lengths2,
                            o_dur_log, o_attn_dur, x_lengths))

    print("KERNEL_OK")
</pallas_src>

<mosaic_0001>
module attributes {stable_mosaic.version = 11 : i64} {
  func.func @_glow_loss_kernel(%arg0: i32, %arg1: i32, %arg2: memref<1x4x128xf32, #tpu.memory_space<vmem>>, %arg3: memref<1x4x128xf32, #tpu.memory_space<vmem>>, %arg4: memref<1x4x128xf32, #tpu.memory_space<vmem>>, %arg5: memref<1x2x128xf32, #tpu.memory_space<vmem>>) attributes {dimension_semantics = [#tpu.dimension_semantics<parallel>, #tpu.dimension_semantics<arbitrary>], iteration_bounds = array<i64: 2, 1>, scalar_prefetch = 0 : i64, scratch_operands = 0 : i64, tpu.core_type = #tpu.core_type<tc>, window_params = [{transform_indices = @transform_0, window_bounds = array<i64: 1, 4, 128>}, {transform_indices = @transform_1, window_bounds = array<i64: 1, 4, 128>}, {transform_indices = @transform_2, window_bounds = array<i64: 1, 4, 128>}, {transform_indices = @transform_3, window_bounds = array<i64: 1, 2, 128>}]} {
    %c0_i32 = arith.constant 0 : i32
    %0 = arith.cmpi eq, %arg1, %c0_i32 : i32
    %1 = arith.extui %0 : i1 to i32
    %c0_i32_0 = arith.constant 0 : i32
    %2 = arith.cmpi ne, %1, %c0_i32_0 : i32
    scf.if %2 {
      %cst_18 = arith.constant 0.000000e+00 : f32
      %28 = vector.broadcast %cst_18 : f32 to vector<1x2x128xf32>
      %c0_19 = arith.constant 0 : index
      %c0_20 = arith.constant 0 : index
      %c0_21 = arith.constant 0 : index
      %29 = vector.load %arg5[%c0_19, %c0_20, %c0_21] : memref<1x2x128xf32, #tpu.memory_space<vmem>>, vector<1x2x128xf32>
      tpu.vector_store %arg5[%c0_19, %c0_20, %c0_21], %28 {strides = array<i32>} : memref<1x2x128xf32, #tpu.memory_space<vmem>>, vector<1x2x128xf32>,
    } else {
    }
    %c0 = arith.constant 0 : index
    %c0_1 = arith.constant 0 : index
    %c0_2 = arith.constant 0 : index
    %3 = vector.load %arg4[%c0, %c0_1, %c0_2] : memref<1x4x128xf32, #tpu.memory_space<vmem>>, vector<1x4x128xf32>
    %4 = vector.shape_cast %3 : vector<1x4x128xf32> to vector<4x128xf32>
    %c0_3 = arith.constant 0 : index
    %c0_4 = arith.constant 0 : index
    %c0_5 = arith.constant 0 : index
    %5 = vector.load %arg2[%c0_3, %c0_4, %c0_5] : memref<1x4x128xf32, #tpu.memory_space<vmem>>, vector<1x4x128xf32>
    %6 = vector.shape_cast %5 : vector<1x4x128xf32> to vector<4x128xf32>
    %c0_6 = arith.constant 0 : index
    %c0_7 = arith.constant 0 : index
    %c0_8 = arith.constant 0 : index
    %7 = vector.load %arg3[%c0_6, %c0_7, %c0_8] : memref<1x4x128xf32, #tpu.memory_space<vmem>>, vector<1x4x128xf32>
    %8 = vector.shape_cast %7 : vector<1x4x128xf32> to vector<4x128xf32>
    %9 = arith.subf %6, %8 : vector<4x128xf32>
    %cst = arith.constant -2.000000e+00 : f32
    %10 = vector.broadcast %cst : f32 to vector<4x128xf32>
    %11 = arith.mulf %10, %4 : vector<4x128xf32>
    %12 = math.exp %11 : vector<4x128xf32>
    %cst_9 = arith.constant 5.000000e-01 : f32
    %13 = vector.broadcast %cst_9 : f32 to vector<4x128xf32>
    %14 = arith.mulf %13, %12 : vector<4x128xf32>
    %15 = arith.mulf %9, %9 : vector<4x128xf32>
    %16 = arith.mulf %14, %15 : vector<4x128xf32>
    %cst_10 = arith.constant dense<0.000000e+00> : vector<128xf32>
    %17 = vector.multi_reduction <add>, %4, %cst_10 [0] : vector<4x128xf32> to vector<128xf32>
    %18 = vector.shape_cast %17 : vector<128xf32> to vector<1x128xf32>
    %cst_11 = arith.constant dense<0.000000e+00> : vector<128xf32>
    %19 = vector.multi_reduction <add>, %16, %cst_11 [0] : vector<4x128xf32> to vector<128xf32>
    %20 = vector.shape_cast %19 : vector<128xf32> to vector<1x128xf32>
    %c0_12 = arith.constant 0 : index
    %c0_13 = arith.constant 0 : index
    %c0_14 = arith.constant 0 : index
    %21 = vector.load %arg5[%c0_12, %c0_13, %c0_14] : memref<1x2x128xf32, #tpu.memory_space<vmem>>, vector<1x2x128xf32>
    %22 = vector.shape_cast %21 : vector<1x2x128xf32> to vector<2x128xf32>
    %23 = tpu.concatenate %18, %20 in 0 : vector<1x128xf32>, vector<1x128xf32> -> vector<2x128xf32>
    %24 = arith.addf %22, %23 : vector<2x128xf32>
    %c0_15 = arith.constant 0 : index
    %c0_16 = arith.constant 0 : index
    %c0_17 = arith.constant 0 : index
    %25 = vector.load %arg5[%c0_15, %c0_16, %c0_17] : memref<1x2x128xf32, #tpu.memory_space<vmem>>, vector<1x2x128xf32>
    %26 = vector.shape_cast %25 : vector<1x2x128xf32> to vector<2x128xf32>
    %27 = vector.shape_cast %24 : vector<2x128xf32> to vector<1x2x128xf32>
    tpu.vector_store %arg5[%c0_15, %c0_16, %c0_17], %27 {strides = array<i32>} : memref<1x2x128xf32, #tpu.memory_space<vmem>>, vector<1x2x128xf32>,
    return
  }
  func.func @transform_0(%arg0: i32, %arg1: i32) -> (i32, i32, i32) {
    %c0_i32 = arith.constant 0 : i32
    %c0_i32_0 = arith.constant 0 : i32
    return %arg0, %c0_i32, %arg1 : i32, i32, i32
  }
  func.func @transform_1(%arg0: i32, %arg1: i32) -> (i32, i32, i32) {
    %c0_i32 = arith.constant 0 : i32
    %c0_i32_0 = arith.constant 0 : i32
    return %arg0, %c0_i32, %arg1 : i32, i32, i32
  }
  func.func @transform_2(%arg0: i32, %arg1: i32) -> (i32, i32, i32) {
    %c0_i32 = arith.constant 0 : i32
    %c0_i32_0 = arith.constant 0 : i32
    return %arg0, %c0_i32, %arg1 : i32, i32, i32
  }
  func.func @transform_3(%arg0: i32, %arg1: i32) -> (i32, i32, i32) {
    %c0_i32 = arith.constant 0 : i32
    %c0_i32_0 = arith.constant 0 : i32
    %c0_i32_1 = arith.constant 0 : i32
    return %arg0, %c0_i32, %c0_i32_0 : i32, i32, i32
  }
}

</mosaic_0001>

<llo_original>
// kernel: tpu_custom_call.1
$region0: #{tpu_custom_call.1}
  #allocation0 [shape = 'u32[]', space=smem, size = 0x4, offset = 0x4, fixed_abs, tag = 'smem constant byte address 0x4 - core index']
  #allocation1 [shape = 'u32[72,128]{1,0:T(1,128)}', space=vmem, size = 0x9000, scoped, tag = 'internal scratch']
  %s0 = inlined_call_operand.hbm [shape: f32[2,4,128], index: 0, kind: input, shape index: {}]
  %s1 = inlined_call_operand.hbm [shape: f32[2,4,128], index: 1, kind: input, shape index: {}]
  %s2 = inlined_call_operand.hbm [shape: f32[2,4,128], index: 2, kind: input, shape index: {}]
  %s3 = inlined_call_operand.hbm [shape: f32[2,2,128], index: 3, kind: output, shape index: {}]
  %s4 = sld [smem:[#allocation0]]
  $region61: #{tpu_custom_call.1} parent=0
    _
  %s6 = ssub.s32 1, %s4
  %s7 = scalar_select 0, %s6, %s4
  $region1: #{tpu_custom_call.1} parent=0
    #allocation2 [shape = 'u8[4096]{0}', space=vmem, size = 0x1000, scoped, tag = 'input window, operand 0']
    #allocation3 [shape = 's32[2]{0}', space=sflag, size = 0x8, scoped, tag = 'scoped memory for tpu_custom_call.1']
    #allocation4 [shape = 's32[2]{0}', space=sflag, size = 0x8, scoped, tag = 'scoped memory for tpu_custom_call.1']
    #allocation5 [shape = 'u8[4096]{0}', space=vmem, size = 0x1000, scoped, tag = 'input window, operand 1']
    #allocation6 [shape = 's32[2]{0}', space=sflag, size = 0x8, scoped, tag = 'scoped memory for tpu_custom_call.1']
    #allocation7 [shape = 'u8[4096]{0}', space=vmem, size = 0x1000, scoped, tag = 'input window, operand 2']
    #allocation8 [shape = 'u8[2048]{0}', space=vmem, size = 0x800, scoped, tag = 'output window, operand 0']
    %8 = vsyncpa [#allocation3], 0
    %s9 = scalar_lea.sflag [#allocation3], 1
    %10 = vsyncpa %s9, 0
    %11 = vsyncpa [#allocation6], 0
    %s12 = scalar_lea.sflag [#allocation6], 1
    %13 = vsyncpa %s12, 0
    %14 = vsyncpa [#allocation4], 0
    %s15 = scalar_lea.sflag [#allocation4], 1
    %16 = vsyncpa %s15, 0
    loop: start=0, step=1, limit=4
    $region2: #{tpu_custom_call.1} parent=1 // loop_pre_header
      _
    $region3: #{tpu_custom_call.1} parent=1 // loop_header
      %s18 = sphi 0, %s22
      %p19 = scmp.ge.s32.totalorder %s18, 4
      %s25 = sphi 0, %s37
      %s26 = sphi 0, %s33
      %s27 = sphi 0, %s25
      %s28 = sphi 0, %s26
      %s29 = sphi 0, %s27
      %s30 = sphi 0, %s28
      %s42 = sphi 0, %s44
      %s45 = sphi 0, %s42
      %s46 = sphi 0, %s45
      %s62 = sphi 0, %s46
      %s70 = sphi 0, %s72
      %s73 = sphi 0, %s70
      %s74 = sphi 0, %s73
      %s90 = sphi 0, %s74
      %s98 = sphi 0, %s100
      %s101 = sphi 0, %s98
      %s102 = sphi 0, %s101
      %s118 = sphi 0, %s102
      %s124 = sphi 0, %s126
      %s127 = sphi 0, %s124
      %s128 = sphi 0, %s127
      %s144 = sphi 0, %s128
    $region4: #{tpu_custom_call.1} parent=1 // loop_header_branch
      %21 = sbr.rel (%p19) target = $region8
    $region5: #{tpu_custom_call.1} parent=1 // loop_body
      %s23 = ssub.s32 %s18, 1
      %s24 = ssub.s32 %s18, 2
      %s31 = sadd.s32 1, %s26
      %p32 = scmp.ge.s32.totalorder %s31, 1
      %s33 = scalar_select %p32, 0, %s31
      %s34 = sadd.s32 1, %s25
      %s35 = scalar_select %p32, %s34, %s25
      %p36 = scmp.ge.s32.totalorder %s35, 2
      %s37 = scalar_select %p36, 0, %s35
      %s38 = ssub.s32 %s25, %s37
      %s39 = ssub.s32 %s26, %s33
      %s40 = sor.u32 %s38, %s39
      %p41 = scmp.eq.s32.totalorder %s40, 0
      %s43 = sadd.s32 %s42, 1
      %s44 = scalar_select %p41, %s42, %s43
      %p47 = pneg %p41
      %p48 = scmp.eq.s32.totalorder %s18, 1
      %p49 = por %p47, %p48
      %p50 = scmp.ne.s32.totalorder %s42, %s45
      %p51 = scmp.eq.s32.totalorder %s18, 0
      %p52 = por %p50, %p51
      %p53 = scmp.ne.s32.totalorder %s42, %s45
      %p54 = scmp.eq.s32.totalorder %s23, 1
      %p55 = por %p53, %p54
      %p56 = scmp.ne.s32.totalorder %s45, %s46
      %p57 = scmp.eq.s32.totalorder %s23, 0
      %p58 = por %p56, %p57
      %p59 = scmp.ne.s32.totalorder %s45, %s46
      %p60 = scmp.eq.s32.totalorder %s24, 1
      %p61 = por %p59, %p60
      %p63 = scmp.ne.s32.totalorder %s46, %s62
      %p64 = scmp.eq.s32.totalorder %s24, 0
      %p65 = por %p63, %p64
      %s66 = ssub.s32 %s25, %s37
      %s67 = ssub.s32 %s26, %s33
      %s68 = sor.u32 %s66, %s67
      %p69 = scmp.eq.s32.totalorder %s68, 0
      %s71 = sadd.s32 %s70, 1
      %s72 = scalar_select %p69, %s70, %s71
      %p75 = pneg %p69
      %p76 = scmp.eq.s32.totalorder %s18, 1
      %p77 = por %p75, %p76
      %p78 = scmp.ne.s32.totalorder %s70, %s73
      %p79 = scmp.eq.s32.totalorder %s18, 0
      %p80 = por %p78, %p79
      %p81 = scmp.ne.s32.totalorder %s70, %s73
      %p82 = scmp.eq.s32.totalorder %s23, 1
      %p83 = por %p81, %p82
      %p84 = scmp.ne.s32.totalorder %s73, %s74
      %p85 = scmp.eq.s32.totalorder %s23, 0
      %p86 = por %p84, %p85
      %p87 = scmp.ne.s32.totalorder %s73, %s74
      %p88 = scmp.eq.s32.totalorder %s24, 1
      %p89 = por %p87, %p88
      %p91 = scmp.ne.s32.totalorder %s74, %s90
      %p92 = scmp.eq.s32.totalorder %s24, 0
      %p93 = por %p91, %p92
      %s94 = ssub.s32 %s25, %s37
      %s95 = ssub.s32 %s26, %s33
      %s96 = sor.u32 %s94, %s95
      %p97 = scmp.eq.s32.totalorder %s96, 0
      %s99 = sadd.s32 %s98, 1
      %s100 = scalar_select %p97, %s98, %s99
      %p103 = pneg %p97
      %p104 = scmp.eq.s32.totalorder %s18, 1
      %p105 = por %p103, %p104
      %p106 = scmp.ne.s32.totalorder %s98, %s101
      %p107 = scmp.eq.s32.totalorder %s18, 0
      %p108 = por %p106, %p107
      %p109 = scmp.ne.s32.totalorder %s98, %s101
      %p110 = scmp.eq.s32.totalorder %s23, 1
      %p111 = por %p109, %p110
      %p112 = scmp.ne.s32.totalorder %s101, %s102
      %p113 = scmp.eq.s32.totalorder %s23, 0
      %p114 = por %p112, %p113
      %p115 = scmp.ne.s32.totalorder %s101, %s102
      %p116 = scmp.eq.s32.totalorder %s24, 1
      %p117 = por %p115, %p116
      %p119 = scmp.ne.s32.totalorder %s102, %s118
      %p120 = scmp.eq.s32.totalorder %s24, 0
      %p121 = por %p119, %p120
      %s122 = ssub.s32 %s25, %s37
      %p123 = scmp.eq.s32.totalorder %s122, 0
      %s125 = sadd.s32 %s124, 1
      %s126 = scalar_select %p123, %s124, %s125
      %p129 = pneg %p123
      %p130 = scmp.eq.s32.totalorder %s18, 1
      %p131 = por %p129, %p130
      %p132 = scmp.ne.s32.totalorder %s124, %s127
      %p133 = scmp.eq.s32.totalorder %s18, 0
      %p134 = por %p132, %p133
      %p135 = scmp.ne.s32.totalorder %s124, %s127
      %p136 = scmp.eq.s32.totalorder %s23, 1
      %p137 = por %p135, %p136
      %p138 = scmp.ne.s32.totalorder %s127, %s128
      %p139 = scmp.eq.s32.totalorder %s23, 0
      %p140 = por %p138, %p139
      %p141 = scmp.ne.s32.totalorder %s127, %s128
      %p142 = scmp.eq.s32.totalorder %s24, 1
      %p143 = por %p141, %p142
      %p145 = scmp.ne.s32.totalorder %s128, %s144
      %p146 = scmp.eq.s32.totalorder %s24, 0
      %p147 = por %p145, %p146
      %p148 = scmp.le.s32.totalorder 1, %s18
      %p149 = scmp.lt.s32.totalorder %s18, 3
      %p150 = pnand %p148, %p149
      %p151 = pneg %p150
      // Predicated region
      $region9: #{tpu_custom_call.1} parent=5 // pred_check
        _
      $region10: #{tpu_custom_call.1} parent=5 // pred_check_branch
        %153 = sbr.rel (%p150) target = $region12
      $region11: #{tpu_custom_call.1} parent=5 // pred_region
        %s154 = ssub.s32 %s18, 1
      $region12: #{tpu_custom_call.1} parent=5 // pred_fallthru
        _
      %p155 = scmp.lt.s32.totalorder %s18, 2
      // Predicated region
      $region13: #{tpu_custom_call.1} parent=5 // pred_check
        %p156 = pneg %p155
      $region14: #{tpu_custom_call.1} parent=5 // pred_check_branch
        %158 = sbr.rel (%p156) target = $region16
      $region15: #{tpu_custom_call.1} parent=5 // pred_region
        // Predicated region
        $region17: #{tpu_custom_call.1} parent=15 // pred_check
          %p159 = pneg %p52
        $region18: #{tpu_custom_call.1} parent=15 // pred_check_branch
          %161 = sbr.rel (%p159) target = $region20
        $region19: #{tpu_custom_call.1} parent=15 // pred_region
          %s162 = sand.u32 %s42, 1
          %s163 = scalar_lea.sflag [#allocation3], %s162
          %s164 = sand.u32 %s42, 1
          %s165 = smul.addr %s164, 4
          %s166 = scalar_lea.vmem [#allocation2], %s165
          %168 = vsyncadd %s163, 0
          %s169 = sadd.s32 %s26, %s25
          %s170 = smul.addr %s169, 4
          %s171 = scalar_lea.hbm %s0, %s170
          %s173 = sshll.u32 %s171, 4
          %s174 = int_to_ptr.hbm [resolvable:$true] %s173
          %s175 = sshll.u32 %s166, 4
          %s176 = int_to_ptr.vmem [resolvable:$true] %s175
          %178 = dma.hbm_to_vmem [thread:$0]  %s174, 64, %s176, %s163
        $region20: #{tpu_custom_call.1} parent=15 // pred_fallthru
          _
        // Predicated region
        $region21: #{tpu_custom_call.1} parent=15 // pred_check
          %p179 = pneg %p80
        $region22: #{tpu_custom_call.1} parent=15 // pred_check_branch
          %181 = sbr.rel (%p179) target = $region24
        $region23: #{tpu_custom_call.1} parent=15 // pred_region
          %s182 = sand.u32 %s18, 1
          %s183 = scalar_lea.sflag [#allocation6], %s182
          %s184 = sand.u32 %s70, 1
          %s185 = smul.addr %s184, 4
          %s186 = scalar_lea.vmem [#allocation5], %s185
          %188 = vsyncadd %s183, 0
          %s189 = sadd.s32 %s26, %s25
          %s190 = smul.addr %s189, 4
          %s191 = scalar_lea.hbm %s1, %s190
          %s193 = sshll.u32 %s191, 4
          %s194 = int_to_ptr.hbm [resolvable:$true] %s193
          %s195 = sshll.u32 %s186, 4
          %s196 = int_to_ptr.vmem [resolvable:$true] %s195
          %198 = dma.hbm_to_vmem [thread:$0]  %s194, 64, %s196, %s183
        $region24: #{tpu_custom_call.1} parent=15 // pred_fallthru
          _
        // Predicated region
        $region25: #{tpu_custom_call.1} parent=15 // pred_check
          %p199 = pneg %p108
        $region26: #{tpu_custom_call.1} parent=15 // pred_check_branch
          %201 = sbr.rel (%p199) target = $region28
        $region27: #{tpu_custom_call.1} parent=15 // pred_region
          %s202 = sand.u32 %s18, 1
          %s203 = scalar_lea.sflag [#allocation6], %s202
          %s204 = sand.u32 %s98, 1
          %s205 = smul.addr %s204, 4
          %s206 = scalar_lea.vmem [#allocation7], %s205
          %208 = vsyncadd %s203, 0
          %s209 = sadd.s32 %s26, %s25
          %s210 = smul.addr %s209, 4
          %s211 = scalar_lea.hbm %s2, %s210
          %s213 = sshll.u32 %s211, 4
          %s214 = int_to_ptr.hbm [resolvable:$true] %s213
          %s215 = sshll.u32 %s206, 4
          %s216 = int_to_ptr.vmem [resolvable:$true] %s215
          %218 = dma.hbm_to_vmem [thread:$0]  %s214, 64, %s216, %s203
        $region28: #{tpu_custom_call.1} parent=15 // pred_fallthru
          _
      $region16: #{tpu_custom_call.1} parent=5 // pred_fallthru
        _
      %p219 = scmp.le.s32.totalorder 1, %s18
      %p220 = scmp.lt.s32.totalorder %s18, 3
      %p221 = pnand %p219, %p220
      %p222 = pneg %p221
      // Predicated region
      $region29: #{tpu_custom_call.1} parent=5 // pred_check
        _
      $region30: #{tpu_custom_call.1} parent=5 // pred_check_branch
        %224 = sbr.rel (%p221) target = $region32
      $region31: #{tpu_custom_call.1} parent=5 // pred_region
        %s225 = ssub.s32 %s18, 1
        %s226 = sand.u32 %s45, 1
        %s227 = scalar_lea.sflag [#allocation3], %s226
        %s228 = sand.u32 %s45, 1
        %s229 = smul.addr %s228, 4
        %s230 = scalar_lea.vmem [#allocation2], %s229
        // Predicated region
        $region33: #{tpu_custom_call.1} parent=31 // pred_check
          %p231 = pneg %p58
        $region34: #{tpu_custom_call.1} parent=31 // pred_check_branch
          %233 = sbr.rel (%p231) target = $region36
        $region35: #{tpu_custom_call.1} parent=31 // pred_region
          %235 = dma.done %s227, 64
        $region36: #{tpu_custom_call.1} parent=31 // pred_fallthru
          _
        %s236 = sand.u32 %s23, 1
        %s237 = scalar_lea.sflag [#allocation6], %s236
        %s238 = sand.u32 %s73, 1
        %s239 = smul.addr %s238, 4
        %s240 = scalar_lea.vmem [#allocation5], %s239
        // Predicated region
        $region37: #{tpu_custom_call.1} parent=31 // pred_check
          %p241 = pneg %p86
        $region38: #{tpu_custom_call.1} parent=31 // pred_check_branch
          %243 = sbr.rel (%p241) target = $region40
        $region39: #{tpu_custom_call.1} parent=31 // pred_region
          %245 = dma.done %s237, 64
        $region40: #{tpu_custom_call.1} parent=31 // pred_fallthru
          _
        %s246 = sand.u32 %s23, 1
        %s247 = scalar_lea.sflag [#allocation6], %s246
        %s248 = sand.u32 %s101, 1
        %s249 = smul.addr %s248, 4
        %s250 = scalar_lea.vmem [#allocation7], %s249
        // Predicated region
        $region41: #{tpu_custom_call.1} parent=31 // pred_check
          %p251 = pneg %p114
        $region42: #{tpu_custom_call.1} parent=31 // pred_check_branch
          %253 = sbr.rel (%p251) target = $region44
        $region43: #{tpu_custom_call.1} parent=31 // pred_region
          %255 = dma.done %s247, 64
        $region44: #{tpu_custom_call.1} parent=31 // pred_fallthru
          _
        %s256 = sand.u32 %s45, 1
        %s257 = scalar_lea.sflag [#allocation3], %s256
        %s258 = sand.u32 %s45, 1
        %s259 = smul.addr %s258, 4
        %s260 = scalar_lea.vmem [#allocation2], %s259
        %p261 = pneg %p58
        %p262 = pneg %p55
        %s263 = sand.u32 %s23, 1
        %s264 = scalar_lea.sflag [#allocation6], %s263
        %s265 = sand.u32 %s73, 1
        %s266 = smul.addr %s265, 4
        %s267 = scalar_lea.vmem [#allocation5], %s266
        %p268 = pneg %p86
        %p269 = pneg %p83
        %s270 = sand.u32 %s23, 1
        %s271 = scalar_lea.sflag [#allocation6], %s270
        %s272 = sand.u32 %s101, 1
        %s273 = smul.addr %s272, 4
        %s274 = scalar_lea.vmem [#allocation7], %s273
        %p275 = pneg %p114
        %p276 = pneg %p111
        %p277 = pneg %p140
        %p278 = pneg %p137
        %s279 = sand.u32 %s127, 1
        %s280 = scalar_lea.sflag [#allocation4], %s279
        %s281 = sand.u32 %s127, 1
        %s282 = smul.addr %s281, 2
        %s283 = scalar_lea.vmem [#allocation8], %s282
        %p284 = scmp.eq.s32.totalorder %s28, 0
        // Predicated region
        $region45: #{tpu_custom_call.1} parent=31 // pred_check
          %p285 = pneg %p284
        $region46: #{tpu_custom_call.1} parent=31 // pred_check_branch
          %287 = sbr.rel (%p285) target = $region48
        $region47: #{tpu_custom_call.1} parent=31 // pred_region
          %288 = vst [vmem:[%s283] sm:$0x3] 0.0
        $region48: #{tpu_custom_call.1} parent=31 // pred_fallthru
          _
        %v289 = vld [vmem:[%s250] sm:$0xf]
        %v290 = vld [vmem:[%s230] sm:$0xf]
        %v291 = vld [vmem:[%s240] sm:$0xf]
        %v292 = vsub.f32 %v290, %v291
        %v293 = vmul.f32 %v289, -2.0
        %v294 = vmul.f32 %v293, 1.442695
        %v295 = vpow.pop %v294
        %v296 = vmul.f32 %v295, 0.5
        %v297 = vmul.f32 %v292, %v292
        %v298 = vmul.f32 %v296, %v297
        %vm299 = vcmask 1043456
        %v300 = vsel %vm299, %v289, 0.0
        %v301 = vrot.slane %v300, 4
        %v302 = vadd.f32 %v300, %v301
        %v303 = vrot.slane %v302, 2
        %v304 = vadd.f32 %v302, %v303
        %v305 = vrot.slane %v304, 1
        %v306 = vadd.f32 %v304, %v305
        %v307 = vsel %vm299, %v298, 0.0
        %v308 = vrot.slane %v307, 4
        %v309 = vadd.f32 %v307, %v308
        %v310 = vrot.slane %v309, 2
        %v311 = vadd.f32 %v309, %v310
        %v312 = vrot.slane %v311, 1
        %v313 = vadd.f32 %v311, %v312
        %v314 = vld [vmem:[%s283] sm:$0x3]
        %vm315 = vcmask 1040384
        %v316 = vsel %vm315, %v306, %v313
        %v317 = vadd.f32 %v314, %v316
        %318 = vst [vmem:[%s283] sm:$0x3] %v317
        %s319 = sand.u32 %s127, 1
        %s320 = scalar_lea.sflag [#allocation4], %s319
        %s321 = sand.u32 %s127, 1
        %s322 = smul.addr %s321, 2
        %s323 = scalar_lea.vmem [#allocation8], %s322
        // Predicated region
        $region49: #{tpu_custom_call.1} parent=31 // pred_check
          %p324 = pneg %p137
        $region50: #{tpu_custom_call.1} parent=31 // pred_check_branch
          %326 = sbr.rel (%p324) target = $region52
        $region51: #{tpu_custom_call.1} parent=31 // pred_region
          %328 = vsyncadd %s320, 0
          %s329 = smul.addr %s27, 2
          %s330 = scalar_lea.hbm %s3, %s329
          %s332 = sshll.u32 %s323, 4
          %s333 = int_to_ptr.vmem [resolvable:$true] %s332
          %s334 = sshll.u32 %s330, 4
          %s335 = int_to_ptr.hbm [resolvable:$true] %s334
          %337 = dma.vmem_to_hbm [thread:$0]  %s333, 32, %s335, %s320
        $region52: #{tpu_custom_call.1} parent=31 // pred_fallthru
          _
      $region32: #{tpu_custom_call.1} parent=5 // pred_fallthru
        _
      %p338 = scmp.le.s32.totalorder 2, %s18
      // Predicated region
      $region53: #{tpu_custom_call.1} parent=5 // pred_check
        %p339 = pneg %p338
      $region54: #{tpu_custom_call.1} parent=5 // pred_check_branch
        %341 = sbr.rel (%p339) target = $region56
      $region55: #{tpu_custom_call.1} parent=5 // pred_region
        %s342 = ssub.s32 %s18, 2
        // Predicated region
        $region57: #{tpu_custom_call.1} parent=55 // pred_check
          %p343 = pneg %p143
        $region58: #{tpu_custom_call.1} parent=55 // pred_check_branch
          %345 = sbr.rel (%p343) target = $region60
        $region59: #{tpu_custom_call.1} parent=55 // pred_region
          %s346 = sand.u32 %s128, 1
          %s347 = scalar_lea.sflag [#allocation4], %s346
          %s348 = sand.u32 %s128, 1
          %s349 = smul.addr %s348, 2
          %s350 = scalar_lea.vmem [#allocation8], %s349
          %352 = dma.done %s347, 32
        $region60: #{tpu_custom_call.1} parent=55 // pred_fallthru
          _
      $region56: #{tpu_custom_call.1} parent=5 // pred_fallthru
        _
    $region6: #{tpu_custom_call.1} parent=1 // loop_footer
      %s22 = sadd.s32 1, %s18
    $region7: #{tpu_custom_call.1} parent=1 // loop_footer_branch
      %17 = sbr.rel target = $region3
    $region8: #{tpu_custom_call.1} parent=1 // loop_exit
      _
    %353 = vsyncpa [#allocation3], 1
    %s354 = scalar_lea.sflag [#allocation3], 1
    %355 = vsyncpa %s354, 1
    %356 = vsyncpa [#allocation6], 1
    %s357 = scalar_lea.sflag [#allocation6], 1
    %358 = vsyncpa %s357, 1
    %359 = vsyncpa [#allocation4], 1
    %s360 = scalar_lea.sflag [#allocation4], 1
    %361 = vsyncpa %s360, 1

</llo_original>
